<compile_context>
chip_gen: v5e
topology: v5e:2x2
jax: 0.10.0
libtpu: 0.0.40
codegen_flags: <defaults>
</compile_context>

<pallas_src>
import jax
import jax.numpy as jnp
from jax.experimental import pallas as pl
from jax.experimental.pallas import tpu as pltpu


def _rnn_encoder_kernel(x_ref, w_fused_ref, b_fused_ref, w_hh_ref, h0_ref, out_ref):
    """Fused (embedding ∘ input-projection) + single-layer tanh RNN; emits final hidden state.

    x_ref      : (T*B, Din)   time-major, pre-flattened input sequence
    w_fused_ref: (Din, H)     w_emb @ w_ih (both pre-transposed to (in, out))
    b_fused_ref: (1, H)       b_emb @ w_ih + b_ih + b_hh
    w_hh_ref   : (H, H)       hidden->hidden weight (transposed)
    h0_ref     : (B, H)       initial hidden state
    out_ref    : (B, H)       h_n[-1]
    """
    B, H = h0_ref.shape
    TB = x_ref.shape[0]
    T = TB // B  # static

    # One batched input projection for all timesteps (amortizes MXU pipeline fill over T).
    # u stays a register value: (T*B, H) = (16, 128) f32 = 2 vregs; no VMEM round trip.
    u = (jnp.dot(x_ref[...], w_fused_ref[...], preferred_element_type=jnp.float32)
         + b_fused_ref[...])

    w_hh = w_hh_ref[...]            # loop-invariant; hoisted out of the recurrence
    h = h0_ref[...]

    # T is static and small; fully unroll so the serial MXU->add->tanh chain is visible
    # to the scheduler and per-step slices of u are static sublane slices.
    for t in range(T):
        u_t = u[t * B:(t + 1) * B, :]
        h = jnp.tanh(u_t + jnp.dot(h, w_hh, preferred_element_type=jnp.float32))

    out_ref[...] = h


def fuse_params(params):
    """Fold the embedding Linear into the RNN input projection (exact in f32).

    Done ONCE outside the per-call jit (params are static across decoder steps).
    """
    hi = jax.lax.Precision.HIGHEST
    w_fused = jnp.dot(params["w_emb"], params["w_ih"],
                      precision=hi, preferred_element_type=jnp.float32)      # (Din, H)
    b_fused = (jnp.dot(params["b_emb"], params["w_ih"],
                       precision=hi, preferred_element_type=jnp.float32)
               + params["b_ih"] + params["b_hh"])                            # (1, H)
    return {"w_fused": w_fused, "b_fused": b_fused, "w_hh": params["w_hh"]}


@jax.jit
def job_proc_time_encoder(proc_times_seq, fused_params, initial_hidden_state=None):
    """proc_times_seq: (B, T, Din) float32, batch_first (PyTorch convention).

    fused_params: output of fuse_params(params).
    Returns h_n[-1, :, :] of shape (B, H).
    """
    B, T, Din = proc_times_seq.shape
    H = fused_params["w_hh"].shape[0]

    # Time-major and flattened in the wrapper: kernel receives (T*B, Din) directly, so no
    # in-kernel reshape / relayout and only 2 padded (8,128) input tiles get DMA'd.
    x_flat = jnp.transpose(proc_times_seq, (1, 0, 2)).reshape(T * B, Din).astype(jnp.float32)

    if initial_hidden_state is None:
        h0 = jnp.zeros((B, H), jnp.float32)
    else:
        # PyTorch h0 is (num_layers, B, H) with num_layers == 1
        h0 = initial_hidden_state[-1].astype(jnp.float32)

    vmem = pl.BlockSpec(memory_space=pltpu.MemorySpace.VMEM)

    out = pl.pallas_call(
        _rnn_encoder_kernel,
        out_shape=jax.ShapeDtypeStruct((B, H), jnp.float32),
        in_specs=[vmem] * 5,
        out_specs=vmem,
    )(x_flat, fused_params["w_fused"], fused_params["b_fused"],
      fused_params["w_hh"], h0)
    return out


def init_params(key, scalar_input_dim=4, embedding_dim=64, hidden_dim=128):
    """Deterministic synthetic parameters (PyTorch-style uniform ±1/sqrt(fan_in))."""
    ks = jax.random.split(key, 6)

    def u(k, shape, fan_in):
        bound = 1.0 / jnp.sqrt(jnp.float32(fan_in))
        return jax.random.uniform(k, shape, jnp.float32, -bound, bound)

    return {
        # stored already transposed relative to torch: (in, out)
        "w_emb": u(ks[0], (scalar_input_dim, embedding_dim), scalar_input_dim),
        "b_emb": u(ks[1], (1, embedding_dim), scalar_input_dim),
        "w_ih":  u(ks[2], (embedding_dim, hidden_dim), hidden_dim),
        "b_ih":  u(ks[3], (1, hidden_dim), hidden_dim),
        "w_hh":  u(ks[4], (hidden_dim, hidden_dim), hidden_dim),
        "b_hh":  u(ks[5], (1, hidden_dim), hidden_dim),
    }


def reference_forward(proc_times_seq, params, initial_hidden_state=None):
    """Pure-JAX reference matching the PyTorch module (rnn_type='RNN', unfused)."""
    B, T, Din = proc_times_seq.shape
    H = params["w_hh"].shape[0]
    emb = proc_times_seq @ params["w_emb"] + params["b_emb"]          # (B, T, E)
    h = (jnp.zeros((B, H), jnp.float32) if initial_hidden_state is None
         else initial_hidden_state[-1])
    for t in range(T):
        h = jnp.tanh(emb[:, t, :] @ params["w_ih"] + params["b_ih"]
                     + h @ params["w_hh"] + params["b_hh"])
    return h


if __name__ == "__main__":
    key = jax.random.PRNGKey(0)
    k_param, k_x = jax.random.split(key)

    B, T, Din = 2, 8, 4          # batch=2, seq_len=8, scalar_input_dim=4
    E, H = 64, 128               # embedding_dim=64, hidden_dim=128

    params = init_params(k_param, scalar_input_dim=Din, embedding_dim=E, hidden_dim=H)
    proc_times_seq = jax.random.uniform(k_x, (B, T, Din), jnp.float32)

    fused = fuse_params(params)                       # once, outside the per-call jit
    out = job_proc_time_encoder(proc_times_seq, fused)
    out = jax.block_until_ready(out)

    ref = reference_forward(proc_times_seq, params)
    assert out.shape == (B, H), out.shape
    # Fusion reassociates the fp32 input projection; allow a few extra ULPs vs. the
    # unfused reference.
    assert jnp.allclose(out, ref, atol=5e-5, rtol=1e-5), float(jnp.max(jnp.abs(out - ref)))

    print("KERNEL_OK")
</pallas_src>

<mosaic_0001>
module attributes {stable_mosaic.version = 11 : i64} {
  func.func @_rnn_encoder_kernel(%arg0: memref<16x4xf32, #tpu.memory_space<vmem>>, %arg1: memref<4x128xf32, #tpu.memory_space<vmem>>, %arg2: memref<1x128xf32, #tpu.memory_space<vmem>>, %arg3: memref<128x128xf32, #tpu.memory_space<vmem>>, %arg4: memref<2x128xf32, #tpu.memory_space<vmem>>, %arg5: memref<2x128xf32, #tpu.memory_space<vmem>>) attributes {dimension_semantics = [], scalar_prefetch = 0 : i64, scratch_operands = 0 : i64, tpu.core_type = #tpu.core_type<tc>} {
    %c0 = arith.constant 0 : index
    %c0_0 = arith.constant 0 : index
    %0 = vector.load %arg0[%c0, %c0_0] : memref<16x4xf32, #tpu.memory_space<vmem>>, vector<16x4xf32>
    %c0_1 = arith.constant 0 : index
    %c0_2 = arith.constant 0 : index
    %1 = vector.load %arg1[%c0_1, %c0_2] : memref<4x128xf32, #tpu.memory_space<vmem>>, vector<4x128xf32>
    %cst = arith.constant dense<0.000000e+00> : vector<16x128xf32>
    %2 = tpu.matmul %0, %1, %cst {dimension_numbers = #tpu.dot_dimension_numbers<[1], [0], [0], [1], [0, 0, 1, 1], [], []>} : vector<16x4xf32>, vector<4x128xf32>, vector<16x128xf32> -> vector<16x128xf32>
    %c0_3 = arith.constant 0 : index
    %c0_4 = arith.constant 0 : index
    %3 = vector.load %arg2[%c0_3, %c0_4] : memref<1x128xf32, #tpu.memory_space<vmem>>, vector<1x128xf32>
    %4 = vector.broadcast %3 : vector<1x128xf32> to vector<16x128xf32>
    %5 = arith.addf %2, %4 : vector<16x128xf32>
    %c0_5 = arith.constant 0 : index
    %c0_6 = arith.constant 0 : index
    %6 = vector.load %arg3[%c0_5, %c0_6] : memref<128x128xf32, #tpu.memory_space<vmem>>, vector<128x128xf32>
    %c0_7 = arith.constant 0 : index
    %c0_8 = arith.constant 0 : index
    %7 = vector.load %arg4[%c0_7, %c0_8] : memref<2x128xf32, #tpu.memory_space<vmem>>, vector<2x128xf32>
    %8 = vector.extract_strided_slice %5 {offsets = [0, 0], sizes = [2, 128], strides = [1, 1]} : vector<16x128xf32> to vector<2x128xf32>
    %cst_9 = arith.constant dense<0.000000e+00> : vector<2x128xf32>
    %9 = tpu.matmul %7, %6, %cst_9 {dimension_numbers = #tpu.dot_dimension_numbers<[1], [0], [0], [1], [0, 0, 1, 1], [], []>} : vector<2x128xf32>, vector<128x128xf32>, vector<2x128xf32> -> vector<2x128xf32>
    %10 = arith.addf %8, %9 : vector<2x128xf32>
    %11 = math.tanh %10 : vector<2x128xf32>
    %12 = vector.extract_strided_slice %5 {offsets = [2, 0], sizes = [2, 128], strides = [1, 1]} : vector<16x128xf32> to vector<2x128xf32>
    %cst_10 = arith.constant dense<0.000000e+00> : vector<2x128xf32>
    %13 = tpu.matmul %11, %6, %cst_10 {dimension_numbers = #tpu.dot_dimension_numbers<[1], [0], [0], [1], [0, 0, 1, 1], [], []>} : vector<2x128xf32>, vector<128x128xf32>, vector<2x128xf32> -> vector<2x128xf32>
    %14 = arith.addf %12, %13 : vector<2x128xf32>
    %15 = math.tanh %14 : vector<2x128xf32>
    %16 = vector.extract_strided_slice %5 {offsets = [4, 0], sizes = [2, 128], strides = [1, 1]} : vector<16x128xf32> to vector<2x128xf32>
    %cst_11 = arith.constant dense<0.000000e+00> : vector<2x128xf32>
    %17 = tpu.matmul %15, %6, %cst_11 {dimension_numbers = #tpu.dot_dimension_numbers<[1], [0], [0], [1], [0, 0, 1, 1], [], []>} : vector<2x128xf32>, vector<128x128xf32>, vector<2x128xf32> -> vector<2x128xf32>
    %18 = arith.addf %16, %17 : vector<2x128xf32>
    %19 = math.tanh %18 : vector<2x128xf32>
    %20 = vector.extract_strided_slice %5 {offsets = [6, 0], sizes = [2, 128], strides = [1, 1]} : vector<16x128xf32> to vector<2x128xf32>
    %cst_12 = arith.constant dense<0.000000e+00> : vector<2x128xf32>
    %21 = tpu.matmul %19, %6, %cst_12 {dimension_numbers = #tpu.dot_dimension_numbers<[1], [0], [0], [1], [0, 0, 1, 1], [], []>} : vector<2x128xf32>, vector<128x128xf32>, vector<2x128xf32> -> vector<2x128xf32>
    %22 = arith.addf %20, %21 : vector<2x128xf32>
    %23 = math.tanh %22 : vector<2x128xf32>
    %24 = vector.extract_strided_slice %5 {offsets = [8, 0], sizes = [2, 128], strides = [1, 1]} : vector<16x128xf32> to vector<2x128xf32>
    %cst_13 = arith.constant dense<0.000000e+00> : vector<2x128xf32>
    %25 = tpu.matmul %23, %6, %cst_13 {dimension_numbers = #tpu.dot_dimension_numbers<[1], [0], [0], [1], [0, 0, 1, 1], [], []>} : vector<2x128xf32>, vector<128x128xf32>, vector<2x128xf32> -> vector<2x128xf32>
    %26 = arith.addf %24, %25 : vector<2x128xf32>
    %27 = math.tanh %26 : vector<2x128xf32>
    %28 = vector.extract_strided_slice %5 {offsets = [10, 0], sizes = [2, 128], strides = [1, 1]} : vector<16x128xf32> to vector<2x128xf32>
    %cst_14 = arith.constant dense<0.000000e+00> : vector<2x128xf32>
    %29 = tpu.matmul %27, %6, %cst_14 {dimension_numbers = #tpu.dot_dimension_numbers<[1], [0], [0], [1], [0, 0, 1, 1], [], []>} : vector<2x128xf32>, vector<128x128xf32>, vector<2x128xf32> -> vector<2x128xf32>
    %30 = arith.addf %28, %29 : vector<2x128xf32>
    %31 = math.tanh %30 : vector<2x128xf32>
    %32 = vector.extract_strided_slice %5 {offsets = [12, 0], sizes = [2, 128], strides = [1, 1]} : vector<16x128xf32> to vector<2x128xf32>
    %cst_15 = arith.constant dense<0.000000e+00> : vector<2x128xf32>
    %33 = tpu.matmul %31, %6, %cst_15 {dimension_numbers = #tpu.dot_dimension_numbers<[1], [0], [0], [1], [0, 0, 1, 1], [], []>} : vector<2x128xf32>, vector<128x128xf32>, vector<2x128xf32> -> vector<2x128xf32>
    %34 = arith.addf %32, %33 : vector<2x128xf32>
    %35 = math.tanh %34 : vector<2x128xf32>
    %36 = vector.extract_strided_slice %5 {offsets = [14, 0], sizes = [2, 128], strides = [1, 1]} : vector<16x128xf32> to vector<2x128xf32>
    %cst_16 = arith.constant dense<0.000000e+00> : vector<2x128xf32>
    %37 = tpu.matmul %35, %6, %cst_16 {dimension_numbers = #tpu.dot_dimension_numbers<[1], [0], [0], [1], [0, 0, 1, 1], [], []>} : vector<2x128xf32>, vector<128x128xf32>, vector<2x128xf32> -> vector<2x128xf32>
    %38 = arith.addf %36, %37 : vector<2x128xf32>
    %39 = math.tanh %38 : vector<2x128xf32>
    %c0_17 = arith.constant 0 : index
    %c0_18 = arith.constant 0 : index
    %40 = vector.load %arg5[%c0_17, %c0_18] : memref<2x128xf32, #tpu.memory_space<vmem>>, vector<2x128xf32>
    tpu.vector_store %arg5[%c0_17, %c0_18], %39 {strides = array<i32>} : memref<2x128xf32, #tpu.memory_space<vmem>>, vector<2x128xf32>,
    return
  }
}

</mosaic_0001>

<llo_original>
// kernel: job_proc_time_encoder.1
$region0: #{job_proc_time_encoder.1}
  #allocation0 [shape = 'u32[]', space=smem, size = 0x4, offset = 0x4, fixed_abs, tag = 'smem constant byte address 0x4 - core index']
  #allocation1 [shape = 'u32[72,128]{1,0:T(1,128)}', space=vmem, size = 0x9000, scoped, tag = 'internal scratch']
  %s0 = inlined_call_operand.vmem [shape: f32[16,4], index: 0, kind: input, shape index: {}]
  %s1 = inlined_call_operand.vmem [shape: f32[4,128], index: 1, kind: input, shape index: {}]
  %s2 = inlined_call_operand.vmem [shape: f32[1,128], index: 2, kind: input, shape index: {}]
  %s3 = inlined_call_operand.hbm [shape: f32[128,128], index: 3, kind: input, shape index: {}]
  %s4 = inlined_call_operand.vmem [shape: f32[2,128], index: 4, kind: input, shape index: {}]
  %s5 = inlined_call_operand.hbm [shape: f32[2,128], index: 5, kind: output, shape index: {}]
  %s6 = sld [smem:[#allocation0]]
  $region34: #{job_proc_time_encoder.1} parent=0
    _
  %s8 = ssub.s32 1, %s6
  %s9 = scalar_select 0, %s8, %s6
  $region1: #{job_proc_time_encoder.1} parent=0
    #allocation2 [shape = 'u8[65536]{0}', space=vmem, size = 0x10000, scoped, tag = 'input window, operand 3, single buffered']
    #allocation3 [shape = 's32[1]{0}', space=sflag, size = 0x4, scoped, tag = 'scoped memory for job_proc_time_encoder.1']
    #allocation4 [shape = 's32[1]{0}', space=sflag, size = 0x4, scoped, tag = 'scoped memory for job_proc_time_encoder.1']
    #allocation5 [shape = 'u8[1024]{0}', space=vmem, size = 0x400, scoped, tag = 'output window, operand 0, single buffered']
    %10 = vsyncpa [#allocation3], 0
    %11 = vsyncpa [#allocation4], 0
    // Predicated region
    $region2: #{job_proc_time_encoder.1} parent=1 // pred_check
      _
    $region3: #{job_proc_time_encoder.1} parent=1 // pred_check_branch
      %13 = sbr.rel (0) target = $region5
    $region4: #{job_proc_time_encoder.1} parent=1 // pred_region
      _
    $region5: #{job_proc_time_encoder.1} parent=1 // pred_fallthru
      _
    // Predicated region
    $region6: #{job_proc_time_encoder.1} parent=1 // pred_check
      _
    $region7: #{job_proc_time_encoder.1} parent=1 // pred_check_branch
      %15 = sbr.rel (0) target = $region9
    $region8: #{job_proc_time_encoder.1} parent=1 // pred_region
      _
    $region9: #{job_proc_time_encoder.1} parent=1 // pred_fallthru
      _
    // Predicated region
    $region10: #{job_proc_time_encoder.1} parent=1 // pred_check
      _
    $region11: #{job_proc_time_encoder.1} parent=1 // pred_check_branch
      %17 = sbr.rel (0) target = $region13
    $region12: #{job_proc_time_encoder.1} parent=1 // pred_region
      _
    $region13: #{job_proc_time_encoder.1} parent=1 // pred_fallthru
      _
    // Predicated region
    $region14: #{job_proc_time_encoder.1} parent=1 // pred_check
      _
    $region15: #{job_proc_time_encoder.1} parent=1 // pred_check_branch
      %19 = sbr.rel (0) target = $region17
    $region16: #{job_proc_time_encoder.1} parent=1 // pred_region
      %21 = vsyncadd [#allocation3], 0
      %s22 = sshll.u32 %s3, 4
      %s23 = int_to_ptr.hbm [resolvable:$true] %s22
      %s24 = sshll.u32 [#allocation2], 4
      %s25 = int_to_ptr.vmem [resolvable:$true] %s24
      %30 = dma.hbm_to_vmem [thread:$0]  %s23, 2048, %s25, [#allocation3], 128, 128, 8
    $region17: #{job_proc_time_encoder.1} parent=1 // pred_fallthru
      _
    // Predicated region
    $region18: #{job_proc_time_encoder.1} parent=1 // pred_check
      _
    $region19: #{job_proc_time_encoder.1} parent=1 // pred_check_branch
      %32 = sbr.rel (0) target = $region21
    $region20: #{job_proc_time_encoder.1} parent=1 // pred_region
      _
    $region21: #{job_proc_time_encoder.1} parent=1 // pred_fallthru
      _
    // Predicated region
    $region22: #{job_proc_time_encoder.1} parent=1 // pred_check
      _
    $region23: #{job_proc_time_encoder.1} parent=1 // pred_check_branch
      %34 = sbr.rel (0) target = $region25
    $region24: #{job_proc_time_encoder.1} parent=1 // pred_region
      %36 = dma.done [#allocation3], 2048
    $region25: #{job_proc_time_encoder.1} parent=1 // pred_fallthru
      _
    %v37 = vld [vmem:[%s0] sm:$0xff]
    %v38 = vld [vmem:[%s0 + $0x8] sm:$0xff]
    %v39 = vld [vmem:[%s1] sm:$0xf]
    %v40 = vld [vmem:[%s2] sm:$0x1]
    %v42 = vperm.slane %v40, 0
    %vm44 = vcmask 31744
    %v46 = vsel %vm44, %v37, 0
    %v49 = vsel %vm44, %v38, 0
    %vm51 = vcmask 1043456
    %v53 = vsel %vm51, %v39, 0
    %55 = vmatpush.msra.mxu0 0.0
    %56 = vmatpush.msra.mxu0 0.0
    %57 = vmatpush.msra.mxu0 0.0
    %58 = vmatpush.msra.mxu0 0.0
    %59 = vmatpush.msra.mxu0 0.0
    %60 = vmatpush.msra.mxu0 0.0
    %61 = vmatpush.msra.mxu0 0.0
    %62 = vmatpush.msra.mxu0 0.0
    %63 = vmatpush.msra.mxu0 0.0
    %64 = vmatpush.msra.mxu0 0.0
    %65 = vmatpush.msra.mxu0 0.0
    %66 = vmatpush.msra.mxu0 0.0
    %67 = vmatpush.msra.mxu0 0.0
    %68 = vmatpush.msra.mxu0 0.0
    %69 = vmatpush.msra.mxu0 0.0
    %70 = vmatpush.msra.mxu0 %v53
    %71 = vmatmul.f32.gmra.mxu0 %v46
    %v72 = vpop.f32.mrf.mxu0
    %v73 = vadd.f32 %v42, %v72
    %74 = vmatmul.f32.gmra.mxu0 %v49
    %v75 = vpop.f32.mrf.mxu0
    %v76 = vadd.f32 %v42, %v75
    %77 = vdwg.mxu0
    %v78 = vld [vmem:[#allocation2] sm:$0xff]
    %v79 = vld [vmem:[#allocation2 + $0x8] sm:$0xff]
    %v80 = vld [vmem:[#allocation2 + $0x10] sm:$0xff]
    %v81 = vld [vmem:[#allocation2 + $0x18] sm:$0xff]
    %v82 = vld [vmem:[#allocation2 + $0x20] sm:$0xff]
    %v83 = vld [vmem:[#allocation2 + $0x28] sm:$0xff]
    %v84 = vld [vmem:[#allocation2 + $0x30] sm:$0xff]
    %v85 = vld [vmem:[#allocation2 + $0x38] sm:$0xff]
    %v86 = vld [vmem:[#allocation2 + $0x40] sm:$0xff]
    %v87 = vld [vmem:[#allocation2 + $0x48] sm:$0xff]
    %v88 = vld [vmem:[#allocation2 + $0x50] sm:$0xff]
    %v89 = vld [vmem:[#allocation2 + $0x58] sm:$0xff]
    %v90 = vld [vmem:[#allocation2 + $0x60] sm:$0xff]
    %v91 = vld [vmem:[#allocation2 + $0x68] sm:$0xff]
    %v92 = vld [vmem:[#allocation2 + $0x70] sm:$0xff]
    %v93 = vld [vmem:[#allocation2 + $0x78] sm:$0xff]
    %v94 = vld [vmem:[%s4] sm:$0x3]
    %95 = vmatpush.msra.mxu0 %v93
    %96 = vmatpush.msra.mxu0 %v92
    %97 = vmatpush.msra.mxu0 %v91
    %98 = vmatpush.msra.mxu0 %v90
    %99 = vmatpush.msra.mxu0 %v89
    %100 = vmatpush.msra.mxu0 %v88
    %101 = vmatpush.msra.mxu0 %v87
    %102 = vmatpush.msra.mxu0 %v86
    %103 = vmatpush.msra.mxu0 %v85
    %104 = vmatpush.msra.mxu0 %v84
    %105 = vmatpush.msra.mxu0 %v83
    %106 = vmatpush.msra.mxu0 %v82
    %107 = vmatpush.msra.mxu0 %v81
    %108 = vmatpush.msra.mxu0 %v80
    %109 = vmatpush.msra.mxu0 %v79
    %110 = vmatpush.msra.mxu0 %v78
    %111 = vmatmul.f32.gmra.mxu0 %v94
    %v112 = vpop.f32.mrf.mxu0
    %v113 = vadd.f32 0.0, %v112
    %114 = vdwg.mxu0
    %v115 = vadd.f32 %v73, %v113
    %v116 = vtanh.pop %v115
    %117 = vmatpush.msra.mxu0 %v93
    %118 = vmatpush.msra.mxu0 %v92
    %119 = vmatpush.msra.mxu0 %v91
    %120 = vmatpush.msra.mxu0 %v90
    %121 = vmatpush.msra.mxu0 %v89
    %122 = vmatpush.msra.mxu0 %v88
    %123 = vmatpush.msra.mxu0 %v87
    %124 = vmatpush.msra.mxu0 %v86
    %125 = vmatpush.msra.mxu0 %v85
    %126 = vmatpush.msra.mxu0 %v84
    %127 = vmatpush.msra.mxu0 %v83
    %128 = vmatpush.msra.mxu0 %v82
    %129 = vmatpush.msra.mxu0 %v81
    %130 = vmatpush.msra.mxu0 %v80
    %131 = vmatpush.msra.mxu0 %v79
    %132 = vmatpush.msra.mxu0 %v78
    %133 = vmatmul.f32.gmra.mxu0 %v116
    %v134 = vpop.f32.mrf.mxu0
    %v135 = vadd.f32 0.0, %v134
    %136 = vdwg.mxu0
    %v138 = vrot.slane %v135, 6
    %v140 = vadd.f32 %v73, %v138
    %v141 = vtanh.pop %v140
    %v143 = vrot.slane %v141, 2
    %145 = vmatpush.msra.mxu0 %v93
    %146 = vmatpush.msra.mxu0 %v92
    %147 = vmatpush.msra.mxu0 %v91
    %148 = vmatpush.msra.mxu0 %v90
    %149 = vmatpush.msra.mxu0 %v89
    %150 = vmatpush.msra.mxu0 %v88
    %151 = vmatpush.msra.mxu0 %v87
    %152 = vmatpush.msra.mxu0 %v86
    %153 = vmatpush.msra.mxu0 %v85
    %154 = vmatpush.msra.mxu0 %v84
    %155 = vmatpush.msra.mxu0 %v83
    %156 = vmatpush.msra.mxu0 %v82
    %157 = vmatpush.msra.mxu0 %v81
    %158 = vmatpush.msra.mxu0 %v80
    %159 = vmatpush.msra.mxu0 %v79
    %160 = vmatpush.msra.mxu0 %v78
    %161 = vmatmul.f32.gmra.mxu0 %v143
    %v162 = vpop.f32.mrf.mxu0
    %v163 = vadd.f32 0.0, %v162
    %164 = vdwg.mxu0
    %v166 = vrot.slane %v163, 4
    %v168 = vadd.f32 %v73, %v166
    %v169 = vtanh.pop %v168
    %v171 = vrot.slane %v169, 4
    %173 = vmatpush.msra.mxu0 %v93
    %174 = vmatpush.msra.mxu0 %v92
    %175 = vmatpush.msra.mxu0 %v91
    %176 = vmatpush.msra.mxu0 %v90
    %177 = vmatpush.msra.mxu0 %v89
    %178 = vmatpush.msra.mxu0 %v88
    %179 = vmatpush.msra.mxu0 %v87
    %180 = vmatpush.msra.mxu0 %v86
    %181 = vmatpush.msra.mxu0 %v85
    %182 = vmatpush.msra.mxu0 %v84
    %183 = vmatpush.msra.mxu0 %v83
    %184 = vmatpush.msra.mxu0 %v82
    %185 = vmatpush.msra.mxu0 %v81
    %186 = vmatpush.msra.mxu0 %v80
    %187 = vmatpush.msra.mxu0 %v79
    %188 = vmatpush.msra.mxu0 %v78
    %189 = vmatmul.f32.gmra.mxu0 %v171
    %v190 = vpop.f32.mrf.mxu0
    %v191 = vadd.f32 0.0, %v190
    %192 = vdwg.mxu0
    %v194 = vrot.slane %v191, 2
    %v196 = vadd.f32 %v73, %v194
    %v197 = vtanh.pop %v196
    %v199 = vrot.slane %v197, 6
    %201 = vmatpush.msra.mxu0 %v93
    %202 = vmatpush.msra.mxu0 %v92
    %203 = vmatpush.msra.mxu0 %v91
    %204 = vmatpush.msra.mxu0 %v90
    %205 = vmatpush.msra.mxu0 %v89
    %206 = vmatpush.msra.mxu0 %v88
    %207 = vmatpush.msra.mxu0 %v87
    %208 = vmatpush.msra.mxu0 %v86
    %209 = vmatpush.msra.mxu0 %v85
    %210 = vmatpush.msra.mxu0 %v84
    %211 = vmatpush.msra.mxu0 %v83
    %212 = vmatpush.msra.mxu0 %v82
    %213 = vmatpush.msra.mxu0 %v81
    %214 = vmatpush.msra.mxu0 %v80
    %215 = vmatpush.msra.mxu0 %v79
    %216 = vmatpush.msra.mxu0 %v78
    %217 = vmatmul.f32.gmra.mxu0 %v199
    %v218 = vpop.f32.mrf.mxu0
    %v219 = vadd.f32 0.0, %v218
    %220 = vdwg.mxu0
    %v221 = vadd.f32 %v76, %v219
    %v222 = vtanh.pop %v221
    %223 = vmatpush.msra.mxu0 %v93
    %224 = vmatpush.msra.mxu0 %v92
    %225 = vmatpush.msra.mxu0 %v91
    %226 = vmatpush.msra.mxu0 %v90
    %227 = vmatpush.msra.mxu0 %v89
    %228 = vmatpush.msra.mxu0 %v88
    %229 = vmatpush.msra.mxu0 %v87
    %230 = vmatpush.msra.mxu0 %v86
    %231 = vmatpush.msra.mxu0 %v85
    %232 = vmatpush.msra.mxu0 %v84
    %233 = vmatpush.msra.mxu0 %v83
    %234 = vmatpush.msra.mxu0 %v82
    %235 = vmatpush.msra.mxu0 %v81
    %236 = vmatpush.msra.mxu0 %v80
    %237 = vmatpush.msra.mxu0 %v79
    %238 = vmatpush.msra.mxu0 %v78
    %239 = vmatmul.f32.gmra.mxu0 %v222
    %v240 = vpop.f32.mrf.mxu0
    %v241 = vadd.f32 0.0, %v240
    %242 = vdwg.mxu0
    %v244 = vrot.slane %v241, 6
    %v246 = vadd.f32 %v76, %v244
    %v247 = vtanh.pop %v246
    %v249 = vrot.slane %v247, 2
    %251 = vmatpush.msra.mxu0 %v93
    %252 = vmatpush.msra.mxu0 %v92
    %253 = vmatpush.msra.mxu0 %v91
    %254 = vmatpush.msra.mxu0 %v90
    %255 = vmatpush.msra.mxu0 %v89
    %256 = vmatpush.msra.mxu0 %v88
    %257 = vmatpush.msra.mxu0 %v87
    %258 = vmatpush.msra.mxu0 %v86
    %259 = vmatpush.msra.mxu0 %v85
    %260 = vmatpush.msra.mxu0 %v84
    %261 = vmatpush.msra.mxu0 %v83
    %262 = vmatpush.msra.mxu0 %v82
    %263 = vmatpush.msra.mxu0 %v81
    %264 = vmatpush.msra.mxu0 %v80
    %265 = vmatpush.msra.mxu0 %v79
    %266 = vmatpush.msra.mxu0 %v78
    %267 = vmatmul.f32.gmra.mxu0 %v249
    %v268 = vpop.f32.mrf.mxu0
    %v269 = vadd.f32 0.0, %v268
    %270 = vdwg.mxu0
    %v272 = vrot.slane %v269, 4
    %v274 = vadd.f32 %v76, %v272
    %v275 = vtanh.pop %v274
    %v277 = vrot.slane %v275, 4
    %279 = vmatpush.msra.mxu0 %v93
    %280 = vmatpush.msra.mxu0 %v92
    %281 = vmatpush.msra.mxu0 %v91
    %282 = vmatpush.msra.mxu0 %v90
    %283 = vmatpush.msra.mxu0 %v89
    %284 = vmatpush.msra.mxu0 %v88
    %285 = vmatpush.msra.mxu0 %v87
    %286 = vmatpush.msra.mxu0 %v86
    %287 = vmatpush.msra.mxu0 %v85
    %288 = vmatpush.msra.mxu0 %v84
    %289 = vmatpush.msra.mxu0 %v83
    %290 = vmatpush.msra.mxu0 %v82
    %291 = vmatpush.msra.mxu0 %v81
    %292 = vmatpush.msra.mxu0 %v80
    %293 = vmatpush.msra.mxu0 %v79
    %294 = vmatpush.msra.mxu0 %v78
    %295 = vmatmul.f32.gmra.mxu0 %v277
    %v296 = vpop.f32.mrf.mxu0
    %v297 = vadd.f32 0.0, %v296
    %298 = vdwg.mxu0
    %v300 = vrot.slane %v297, 2
    %v302 = vadd.f32 %v76, %v300
    %v303 = vtanh.pop %v302
    %304 = vst [vmem:[#allocation5 - $0x6] sm:$0xc0] %v303
    // Predicated region
    $region26: #{job_proc_time_encoder.1} parent=1 // pred_check
      _
    $region27: #{job_proc_time_encoder.1} parent=1 // pred_check_branch
      %306 = sbr.rel (0) target = $region29
    $region28: #{job_proc_time_encoder.1} parent=1 // pred_region
      %308 = vsyncadd [#allocation4], 0
      %s310 = sshll.u32 [#allocation5], 4
      %s311 = int_to_ptr.vmem [resolvable:$true] %s310
      %s312 = sshll.u32 %s5, 4
      %s313 = int_to_ptr.hbm [resolvable:$true] %s312
      %315 = dma.vmem_to_hbm [thread:$0]  %s311, 32, %s313, [#allocation4]
    $region29: #{job_proc_time_encoder.1} parent=1 // pred_fallthru
      _
    // Predicated region
    $region30: #{job_proc_time_encoder.1} parent=1 // pred_check
      _
    $region31: #{job_proc_time_encoder.1} parent=1 // pred_check_branch
      %317 = sbr.rel (0) target = $region33
    $region32: #{job_proc_time_encoder.1} parent=1 // pred_region
      %319 = dma.done [#allocation4], 32
    $region33: #{job_proc_time_encoder.1} parent=1 // pred_fallthru
      _
    %320 = vsyncpa [#allocation3], 1
    %321 = vsyncpa [#allocation4], 1

</llo_original>
